<compile_context>
chip_gen: v7x
topology: tpu7x:2x2x1
jax: 0.10.0
libtpu: 0.0.40
codegen_flags: <defaults>
</compile_context>

<pallas_src>
import functools

import jax
import jax.numpy as jnp
from jax.experimental import pallas as pl
from jax.experimental.pallas import tpu as pltpu

# ----------------------------- config (small, deterministic) -----------------
B = 2                  # batch
CIN = 3                # RGB input channels (backbone expects 3-channel images)
H = W = 16             # spatial
HW = H * W             # 256
BACKBONE_OUT = 128     # backbone feature width ("backbone_outputs")
USE_AGE = True
USE_SEX = True
SEX_CLASSES = 2
META_IN = 1 * USE_AGE + SEX_CLASSES * USE_SEX       # 3
META_PAD = 8           # meta input lane-padded to 8 (zero cols 3..7)
TRANSFORM_META = 8     # meta_layer = Linear(META_IN, 8) + ReLU
HIDDEN = 32            # head hidden_features
N_OUT = 3              # head final Linear -> 3 classes
OUT_PAD = 128          # head output padded to a lane-dense 128-wide block
KPAD = 128             # im2col contraction dim (9*CIN=27) zero-padded to 128

# ------------------ packed parameter slab (all row offsets 8-aligned) --------
SLAB_LANES = 128
ROW_BCONV = 0          # b_conv      (1, BACKBONE_OUT)
ROW_WM = 8             # wm          (META_IN, TRANSFORM_META), rows 3..7 zero
ROW_BM = 16            # bm          (1, TRANSFORM_META)
ROW_W1M = 24           # w1m         (TRANSFORM_META, HIDDEN)
ROW_B1 = 32            # b1          (1, HIDDEN)
ROW_W2 = 40            # w2 pad      (HIDDEN, OUT_PAD), lanes 3..127 zero
ROW_B2 = 72            # b2 pad      (1, OUT_PAD),      lanes 3..127 zero
ROW_W1F = 80           # w1f         (BACKBONE_OUT, HIDDEN)
ROW_WCONV = 208        # w_conv pad  (KPAD, BACKBONE_OUT), rows 27..127 zero
SLAB_ROWS = 336        # 336 * 128 * 4B = 172 KiB


# ----------------------------- fused kernel ----------------------------------
def slice2d_kernel(xcol_ref, meta_ref, slab_ref, out_ref, *, bsz, hw):
    # --- synthetic backbone: 3x3 conv (stacked im2col matmul) + bias + ReLU ---
    w_conv = slab_ref[ROW_WCONV:ROW_WCONV + KPAD, :]                 # [128, COUT]
    b_conv = slab_ref[ROW_BCONV:ROW_BCONV + 1, :]                    # [1,   COUT]
    conv = jnp.dot(xcol_ref[...], w_conv,
                   preferred_element_type=jnp.float32) + b_conv      # [B*HW, COUT]
    conv = jnp.maximum(conv, 0.0)

    # --- global-average-pool as a block-diagonal pooling matmul (stays on MXU) ---
    rows = jax.lax.broadcasted_iota(jnp.int32, (bsz, bsz * hw), 0)
    cols = jax.lax.broadcasted_iota(jnp.int32, (bsz, bsz * hw), 1)
    in_img = (cols >= rows * hw) & (cols < (rows + 1) * hw)
    pool = jnp.where(in_img, 1.0 / hw, 0.0).astype(jnp.float32)      # [B, B*HW]
    feat = jnp.dot(pool, conv, preferred_element_type=jnp.float32)   # [B, COUT]

    # --- meta layer: Linear(META_IN, TM) + ReLU (padded meta cols hit zero wm rows) ---
    wm = slab_ref[ROW_WM:ROW_WM + META_PAD, 0:TRANSFORM_META]        # [8, TM]
    bm = slab_ref[ROW_BM:ROW_BM + 1, 0:TRANSFORM_META]               # [1, TM]
    meta_h = jnp.maximum(
        jnp.dot(meta_ref[...], wm, preferred_element_type=jnp.float32) + bm,
        0.0)                                                         # [B, TM]

    # --- head: Linear -> ReLU -> [dropout=identity] -> Linear(3, lane-padded) ---
    # concat([feat, meta_h], 1) @ W1  ==  feat @ W1[:F] + meta_h @ W1[F:]
    w1f = slab_ref[ROW_W1F:ROW_W1F + BACKBONE_OUT, 0:HIDDEN]         # [COUT, HIDDEN]
    w1m = slab_ref[ROW_W1M:ROW_W1M + TRANSFORM_META, 0:HIDDEN]       # [TM,   HIDDEN]
    b1 = slab_ref[ROW_B1:ROW_B1 + 1, 0:HIDDEN]                       # [1,    HIDDEN]
    h = jnp.maximum(
        jnp.dot(feat, w1f, preferred_element_type=jnp.float32)
        + jnp.dot(meta_h, w1m, preferred_element_type=jnp.float32)
        + b1, 0.0)                                                   # [B, HIDDEN]
    # TODO(synk): nn.Dropout is identity here (inference mode).
    w2 = slab_ref[ROW_W2:ROW_W2 + HIDDEN, :]                         # [HIDDEN, 128]
    b2 = slab_ref[ROW_B2:ROW_B2 + 1, :]                              # [1,      128]
    out_ref[...] = jnp.dot(h, w2, preferred_element_type=jnp.float32) + b2


def run_slice2d(x_col, meta_x, slab):
    M, kpad = x_col.shape              # [B*HW, 128]
    Bn, mpad = meta_x.shape            # [B, 8]
    kernel = functools.partial(slice2d_kernel, bsz=Bn, hw=M // Bn)
    return pl.pallas_call(
        kernel,
        out_shape=jax.ShapeDtypeStruct((Bn, OUT_PAD), jnp.float32),
        grid_spec=pltpu.PrefetchScalarGridSpec(
            num_scalar_prefetch=0,
            grid=(1,),                 # whole batch in one step (no per-step overhead)
            in_specs=[
                pl.BlockSpec((M, kpad), lambda i: (0, 0)),            # stacked im2col
                pl.BlockSpec((Bn, mpad), lambda i: (0, 0)),           # meta (full tiny array)
                pl.BlockSpec((SLAB_ROWS, SLAB_LANES), lambda i: (0, 0)),  # all weights, one DMA
            ],
            out_specs=pl.BlockSpec((Bn, OUT_PAD), lambda i: (0, 0)),  # one lane-dense store
        ),
        compiler_params=pltpu.CompilerParams(
            # Single step; deliberately NOT split across v7x's 2 TensorCores at B=2
            # (per-core prologue would dominate the ~1 MFLOP/image of work).
            dimension_semantics=("arbitrary",),
        ),
    )(x_col, meta_x, slab)


# ----------------------------- wrapper glue -----------------------------------
def im2col_3x3(x_nhwc):
    """Same-padded 3x3 patch extraction (pure layout glue). -> [B, HW, 9*C]."""
    Bn, Hh, Ww, C = x_nhwc.shape
    xp = jnp.pad(x_nhwc, ((0, 0), (1, 1), (1, 1), (0, 0)))
    cols = [xp[:, dy:dy + Hh, dx:dx + Ww, :] for dy in range(3) for dx in range(3)]
    return jnp.concatenate(cols, axis=-1).reshape(Bn, Hh * Ww, 9 * C)


def pack_param_slab(params):
    """Pack ALL parameters into one (SLAB_ROWS, 128) f32 slab.

    Zero-padding guarantees: wm rows META_IN..7 are zero, w_conv rows 27..127 are
    zero, and w2/b2 lanes N_OUT..127 are zero (so output lanes >= 3 are exact zeros).
    """
    def put(slab, row, a):
        r, c = a.shape
        return slab.at[row:row + r, 0:c].set(a)

    slab = jnp.zeros((SLAB_ROWS, SLAB_LANES), jnp.float32)
    slab = put(slab, ROW_BCONV, params["b_conv"])
    slab = put(slab, ROW_WM, params["wm"])
    slab = put(slab, ROW_BM, params["bm"])
    slab = put(slab, ROW_W1M, params["w1m"])
    slab = put(slab, ROW_B1, params["b1"])
    slab = put(slab, ROW_W2, params["w2"])
    slab = put(slab, ROW_B2, params["b2"])
    slab = put(slab, ROW_W1F, params["w1f"])
    slab = put(slab, ROW_WCONV, params["w_conv_col"])
    return slab


def slice2d_forward(x_nchw, age, sex, params):
    """Full forward pass. x_nchw: [B, CIN, H, W] (PyTorch layout)."""
    Bn = x_nchw.shape[0]
    x_nhwc = jnp.transpose(x_nchw, (0, 2, 3, 1)).astype(jnp.float32)
    x_col = im2col_3x3(x_nhwc).reshape(Bn * HW, 9 * CIN)             # [B*HW, 27]
    x_col = jnp.pad(x_col, ((0, 0), (0, KPAD - 9 * CIN)))            # [B*HW, 128] lane-dense
    meta_x = jnp.concatenate([age.reshape(-1, 1), sex],
                             axis=1).astype(jnp.float32)             # [B, META_IN]
    meta_x = jnp.pad(meta_x, ((0, 0), (0, META_PAD - META_IN)))      # [B, 8]
    slab = pack_param_slab(params)
    out_pad = run_slice2d(x_col, meta_x, slab)                       # [B, 128]
    return out_pad[:, :N_OUT]                                        # [B, 3]


def slice2d_reference(x_nchw, age, sex, params):
    """Pure-JAX reference for correctness checking."""
    x_nhwc = jnp.transpose(x_nchw, (0, 2, 3, 1)).astype(jnp.float32)
    x_col = im2col_3x3(x_nhwc)                                       # [B, HW, 27]
    conv = jnp.maximum(
        jnp.einsum("bpk,kc->bpc", x_col, params["w_conv_col"]) + params["b_conv"], 0.0)
    feat = jnp.mean(conv, axis=1)
    meta_x = jnp.concatenate([age.reshape(-1, 1), sex], axis=1).astype(jnp.float32)
    meta_h = jnp.maximum(meta_x @ params["wm"] + params["bm"], 0.0)
    x_cat = jnp.concatenate([feat, meta_h], axis=1)
    w1 = jnp.concatenate([params["w1f"], params["w1m"]], axis=0)
    h = jnp.maximum(x_cat @ w1 + params["b1"], 0.0)
    return h @ params["w2"] + params["b2"]


def init_params(key):
    ks = jax.random.split(key, 9)
    return {
        "w_conv_col": 0.1 * jax.random.normal(ks[0], (9 * CIN, BACKBONE_OUT), jnp.float32),
        "b_conv": 0.1 * jax.random.normal(ks[1], (1, BACKBONE_OUT), jnp.float32),
        "wm": 0.1 * jax.random.normal(ks[2], (META_IN, TRANSFORM_META), jnp.float32),
        "bm": 0.1 * jax.random.normal(ks[3], (1, TRANSFORM_META), jnp.float32),
        "w1f": 0.1 * jax.random.normal(ks[4], (BACKBONE_OUT, HIDDEN), jnp.float32),
        "w1m": 0.1 * jax.random.normal(ks[5], (TRANSFORM_META, HIDDEN), jnp.float32),
        "b1": 0.1 * jax.random.normal(ks[6], (1, HIDDEN), jnp.float32),
        "w2": 0.1 * jax.random.normal(ks[7], (HIDDEN, N_OUT), jnp.float32),
        "b2": 0.1 * jax.random.normal(ks[8], (1, N_OUT), jnp.float32),
    }


if __name__ == "__main__":
    key = jax.random.PRNGKey(0)
    kx, ka, ks_, kp = jax.random.split(key, 4)

    x = jax.random.normal(kx, (B, CIN, H, W), jnp.float32)           # NCHW like PyTorch
    age = jax.random.uniform(ka, (B,), jnp.float32, 20.0, 80.0)
    sex_idx = jax.random.randint(ks_, (B,), 0, SEX_CLASSES)
    sex = jax.nn.one_hot(sex_idx, SEX_CLASSES, dtype=jnp.float32)    # [B, SEX_CLASSES]

    params = init_params(kp)

    forward = jax.jit(slice2d_forward)
    out = jax.block_until_ready(forward(x, age, sex, params))

    ref = jax.block_until_ready(slice2d_reference(x, age, sex, params))
    if out.shape != (B, N_OUT):
        raise AssertionError(f"bad output shape {out.shape}")
    # tolerance slightly above 1e-4: MXU pooling-matmul GAP vs jnp.mean differ
    # only in fp32 reduction order.
    if not jnp.allclose(out, ref, atol=2e-4, rtol=2e-4):
        raise AssertionError("Pallas output mismatch vs JAX reference")

    print("KERNEL_OK")
</pallas_src>

<mosaic_0001>
module attributes {stable_mosaic.version = 11 : i64} {
  func.func @slice2d_kernel(%arg0: i32, %arg1: memref<512x128xf32, #tpu.memory_space<vmem>>, %arg2: memref<2x8xf32, #tpu.memory_space<vmem>>, %arg3: memref<336x128xf32, #tpu.memory_space<vmem>>, %arg4: memref<2x128xf32, #tpu.memory_space<vmem>>) attributes {dimension_semantics = [#tpu.dimension_semantics<arbitrary>], iteration_bounds = array<i64: 1>, scalar_prefetch = 0 : i64, scratch_operands = 0 : i64, tpu.core_type = #tpu.core_type<tc>, window_params = [{pipeline_mode = #tpu.pipeline_mode<synchronous>, transform_indices = @transform_0, window_bounds = array<i64: 512, 128>}, {pipeline_mode = #tpu.pipeline_mode<synchronous>, transform_indices = @transform_1, window_bounds = array<i64: 2, 8>}, {pipeline_mode = #tpu.pipeline_mode<synchronous>, transform_indices = @transform_2, window_bounds = array<i64: 336, 128>}, {pipeline_mode = #tpu.pipeline_mode<synchronous>, transform_indices = @transform_3, window_bounds = array<i64: 2, 128>}]} {
    %c208 = arith.constant 208 : index
    %c0 = arith.constant 0 : index
    %0 = vector.load %arg3[%c208, %c0] : memref<336x128xf32, #tpu.memory_space<vmem>>, vector<128x128xf32>
    %c0_0 = arith.constant 0 : index
    %c0_1 = arith.constant 0 : index
    %1 = vector.load %arg3[%c0_0, %c0_1] : memref<336x128xf32, #tpu.memory_space<vmem>>, vector<1x128xf32>
    %c0_2 = arith.constant 0 : index
    %c0_3 = arith.constant 0 : index
    %2 = vector.load %arg1[%c0_2, %c0_3] : memref<512x128xf32, #tpu.memory_space<vmem>>, vector<512x128xf32>
    %cst = arith.constant dense<0.000000e+00> : vector<512x128xf32>
    %3 = tpu.matmul %2, %0, %cst {dimension_numbers = #tpu.dot_dimension_numbers<[1], [0], [0], [1], [0, 0, 1, 1], [], []>} : vector<512x128xf32>, vector<128x128xf32>, vector<512x128xf32> -> vector<512x128xf32>
    %4 = vector.broadcast %1 : vector<1x128xf32> to vector<512x128xf32>
    %5 = arith.addf %3, %4 : vector<512x128xf32>
    %cst_4 = arith.constant 0.000000e+00 : f32
    %6 = vector.broadcast %cst_4 : f32 to vector<512x128xf32>
    %7 = arith.maximumf %5, %6 : vector<512x128xf32>
    %8 = tpu.iota {dimensions = array<i32: 0>} : vector<2x512xi32>
    %9 = tpu.iota {dimensions = array<i32: 1>} : vector<2x512xi32>
    %c256_i32 = arith.constant 256 : i32
    %10 = vector.broadcast %c256_i32 : i32 to vector<2x512xi32>
    %11 = arith.muli %8, %10 : vector<2x512xi32>
    %12 = arith.cmpi sge, %9, %11 : vector<2x512xi32>
    %c1_i32 = arith.constant 1 : i32
    %13 = vector.broadcast %c1_i32 : i32 to vector<2x512xi32>
    %14 = arith.addi %8, %13 : vector<2x512xi32>
    %c256_i32_5 = arith.constant 256 : i32
    %15 = vector.broadcast %c256_i32_5 : i32 to vector<2x512xi32>
    %16 = arith.muli %14, %15 : vector<2x512xi32>
    %17 = arith.cmpi slt, %9, %16 : vector<2x512xi32>
    %18 = arith.andi %12, %17 : vector<2x512xi1>
    %cst_6 = arith.constant 3.906250e-03 : f32
    %cst_7 = arith.constant 0.000000e+00 : f32
    %19 = vector.broadcast %cst_6 : f32 to vector<2x512xf32>
    %20 = vector.broadcast %cst_7 : f32 to vector<2x512xf32>
    %21 = arith.select %18, %19, %20 : vector<2x512xi1>, vector<2x512xf32>
    %cst_8 = arith.constant dense<0.000000e+00> : vector<2x128xf32>
    %22 = tpu.matmul %21, %7, %cst_8 {dimension_numbers = #tpu.dot_dimension_numbers<[1], [0], [0], [1], [0, 0, 1, 1], [], []>} : vector<2x512xf32>, vector<512x128xf32>, vector<2x128xf32> -> vector<2x128xf32>
    %c8 = arith.constant 8 : index
    %c0_9 = arith.constant 0 : index
    %23 = vector.load %arg3[%c8, %c0_9] : memref<336x128xf32, #tpu.memory_space<vmem>>, vector<8x8xf32>
    %c16 = arith.constant 16 : index
    %c0_10 = arith.constant 0 : index
    %24 = vector.load %arg3[%c16, %c0_10] : memref<336x128xf32, #tpu.memory_space<vmem>>, vector<1x8xf32>
    %c0_11 = arith.constant 0 : index
    %c0_12 = arith.constant 0 : index
    %25 = vector.load %arg2[%c0_11, %c0_12] : memref<2x8xf32, #tpu.memory_space<vmem>>, vector<2x8xf32>
    %cst_13 = arith.constant dense<0.000000e+00> : vector<2x8xf32>
    %26 = tpu.matmul %25, %23, %cst_13 {dimension_numbers = #tpu.dot_dimension_numbers<[1], [0], [0], [1], [0, 0, 1, 1], [], []>} : vector<2x8xf32>, vector<8x8xf32>, vector<2x8xf32> -> vector<2x8xf32>
    %27 = vector.broadcast %24 : vector<1x8xf32> to vector<2x8xf32>
    %28 = arith.addf %26, %27 : vector<2x8xf32>
    %cst_14 = arith.constant 0.000000e+00 : f32
    %29 = vector.broadcast %cst_14 : f32 to vector<2x8xf32>
    %30 = arith.maximumf %28, %29 : vector<2x8xf32>
    %c80 = arith.constant 80 : index
    %c0_15 = arith.constant 0 : index
    %31 = vector.load %arg3[%c80, %c0_15] : memref<336x128xf32, #tpu.memory_space<vmem>>, vector<128x32xf32>
    %c24 = arith.constant 24 : index
    %c0_16 = arith.constant 0 : index
    %32 = vector.load %arg3[%c24, %c0_16] : memref<336x128xf32, #tpu.memory_space<vmem>>, vector<8x32xf32>
    %c32 = arith.constant 32 : index
    %c0_17 = arith.constant 0 : index
    %33 = vector.load %arg3[%c32, %c0_17] : memref<336x128xf32, #tpu.memory_space<vmem>>, vector<1x32xf32>
    %cst_18 = arith.constant dense<0.000000e+00> : vector<2x32xf32>
    %34 = tpu.matmul %22, %31, %cst_18 {dimension_numbers = #tpu.dot_dimension_numbers<[1], [0], [0], [1], [0, 0, 1, 1], [], []>} : vector<2x128xf32>, vector<128x32xf32>, vector<2x32xf32> -> vector<2x32xf32>
    %cst_19 = arith.constant dense<0.000000e+00> : vector<2x32xf32>
    %35 = tpu.matmul %30, %32, %cst_19 {dimension_numbers = #tpu.dot_dimension_numbers<[1], [0], [0], [1], [0, 0, 1, 1], [], []>} : vector<2x8xf32>, vector<8x32xf32>, vector<2x32xf32> -> vector<2x32xf32>
    %36 = arith.addf %34, %35 : vector<2x32xf32>
    %37 = vector.broadcast %33 : vector<1x32xf32> to vector<2x32xf32>
    %38 = arith.addf %36, %37 : vector<2x32xf32>
    %cst_20 = arith.constant 0.000000e+00 : f32
    %39 = vector.broadcast %cst_20 : f32 to vector<2x32xf32>
    %40 = arith.maximumf %38, %39 : vector<2x32xf32>
    %c40 = arith.constant 40 : index
    %c0_21 = arith.constant 0 : index
    %41 = vector.load %arg3[%c40, %c0_21] : memref<336x128xf32, #tpu.memory_space<vmem>>, vector<32x128xf32>
    %c72 = arith.constant 72 : index
    %c0_22 = arith.constant 0 : index
    %42 = vector.load %arg3[%c72, %c0_22] : memref<336x128xf32, #tpu.memory_space<vmem>>, vector<1x128xf32>
    %cst_23 = arith.constant dense<0.000000e+00> : vector<2x128xf32>
    %43 = tpu.matmul %40, %41, %cst_23 {dimension_numbers = #tpu.dot_dimension_numbers<[1], [0], [0], [1], [0, 0, 1, 1], [], []>} : vector<2x32xf32>, vector<32x128xf32>, vector<2x128xf32> -> vector<2x128xf32>
    %44 = vector.broadcast %42 : vector<1x128xf32> to vector<2x128xf32>
    %45 = arith.addf %43, %44 : vector<2x128xf32>
    %c0_24 = arith.constant 0 : index
    %c0_25 = arith.constant 0 : index
    %46 = vector.load %arg4[%c0_24, %c0_25] : memref<2x128xf32, #tpu.memory_space<vmem>>, vector<2x128xf32>
    tpu.vector_store %arg4[%c0_24, %c0_25], %45 {strides = array<i32>} : memref<2x128xf32, #tpu.memory_space<vmem>>, vector<2x128xf32>,
    return
  }
  func.func @transform_0(%arg0: i32) -> (i32, i32) {
    %c0_i32 = arith.constant 0 : i32
    %c0_i32_0 = arith.constant 0 : i32
    %c0_i32_1 = arith.constant 0 : i32
    return %c0_i32, %c0_i32_0 : i32, i32
  }
  func.func @transform_1(%arg0: i32) -> (i32, i32) {
    %c0_i32 = arith.constant 0 : i32
    %c0_i32_0 = arith.constant 0 : i32
    %c0_i32_1 = arith.constant 0 : i32
    return %c0_i32, %c0_i32_0 : i32, i32
  }
  func.func @transform_2(%arg0: i32) -> (i32, i32) {
    %c0_i32 = arith.constant 0 : i32
    %c0_i32_0 = arith.constant 0 : i32
    %c0_i32_1 = arith.constant 0 : i32
    return %c0_i32, %c0_i32_0 : i32, i32
  }
  func.func @transform_3(%arg0: i32) -> (i32, i32) {
    %c0_i32 = arith.constant 0 : i32
    %c0_i32_0 = arith.constant 0 : i32
    %c0_i32_1 = arith.constant 0 : i32
    return %c0_i32, %c0_i32_0 : i32, i32
  }
}

</mosaic_0001>

<llo_original>
// kernel: slice2d_forward.1
$region0: #{slice2d_forward.1}
  #allocation0 [shape = 'u32[]', space=smem, size = 0x4, offset = 0x4, fixed_abs, tag = 'smem constant byte address 0x4 - core index']
  #allocation1 [shape = 'u32[144,128]{1,0:T(1,128)}', space=vmem, size = 0x12000, scoped, tag = 'internal scratch']
  %s0 = inlined_call_operand.vmem [shape: f32[512,128], index: 0, kind: input, shape index: {}]
  %s1 = inlined_call_operand.vmem [shape: f32[2,8], index: 1, kind: input, shape index: {}]
  %s2 = inlined_call_operand.vmem [shape: f32[336,128], index: 2, kind: input, shape index: {}]
  %s3 = inlined_call_operand.hbm [shape: f32[2,128], index: 3, kind: output, shape index: {}]
  %s4 = sld [smem:[#allocation0]]
  $region22: #{slice2d_forward.1} parent=0
    _
  %s6 = ssub.s32 1, %s4
  %s7 = scalar_select 0, %s6, %s4
  $region1: #{slice2d_forward.1} parent=0
    #allocation2 [shape = 'u8[1024]{0}', space=vmem, size = 0x400, scoped, tag = 'output window, operand 0, single buffered']
    #allocation3 [shape = 's32[1]{0}', space=sflag, size = 0x4, scoped, tag = 'scoped memory for slice2d_forward.1']
    %8 = vsyncpa [#allocation3], 0
    // Predicated region
    $region2: #{slice2d_forward.1} parent=1 // pred_check
      _
    $region3: #{slice2d_forward.1} parent=1 // pred_check_branch
      %10 = sbr.rel (0) target = $region5
    $region4: #{slice2d_forward.1} parent=1 // pred_region
      _
    $region5: #{slice2d_forward.1} parent=1 // pred_fallthru
      _
    // Predicated region
    $region6: #{slice2d_forward.1} parent=1 // pred_check
      _
    $region7: #{slice2d_forward.1} parent=1 // pred_check_branch
      %12 = sbr.rel (0) target = $region9
    $region8: #{slice2d_forward.1} parent=1 // pred_region
      _
    $region9: #{slice2d_forward.1} parent=1 // pred_fallthru
      _
    // Predicated region
    $region10: #{slice2d_forward.1} parent=1 // pred_check
      _
    $region11: #{slice2d_forward.1} parent=1 // pred_check_branch
      %14 = sbr.rel (0) target = $region13
    $region12: #{slice2d_forward.1} parent=1 // pred_region
      _
    $region13: #{slice2d_forward.1} parent=1 // pred_fallthru
      _
    %v15 = vld [vmem:[%s2 + $0xd0] sm:$0xff]
    %v16 = vld [vmem:[%s2 + $0xd8] sm:$0xff]
    %v17 = vld [vmem:[%s2 + $0xe0] sm:$0xff]
    %v18 = vld [vmem:[%s2 + $0xe8] sm:$0xff]
    %v19 = vld [vmem:[%s2 + $0xf0] sm:$0xff]
    %v20 = vld [vmem:[%s2 + $0xf8] sm:$0xff]
    %v21 = vld [vmem:[%s2 + $0x100] sm:$0xff]
    %v22 = vld [vmem:[%s2 + $0x108] sm:$0xff]
    %v23 = vld [vmem:[%s2 + $0x110] sm:$0xff]
    %v24 = vld [vmem:[%s2 + $0x118] sm:$0xff]
    %v25 = vld [vmem:[%s2 + $0x120] sm:$0xff]
    %v26 = vld [vmem:[%s2 + $0x128] sm:$0xff]
    %v27 = vld [vmem:[%s2 + $0x130] sm:$0xff]
    %v28 = vld [vmem:[%s2 + $0x138] sm:$0xff]
    %v29 = vld [vmem:[%s2 + $0x140] sm:$0xff]
    %v30 = vld [vmem:[%s2 + $0x148] sm:$0xff]
    %v31 = vld [vmem:[%s2] sm:$0x1]
    %v32 = vld [vmem:[%s0] sm:$0xff]
    %v33 = vld [vmem:[%s0 + $0x8] sm:$0xff]
    %v34 = vld [vmem:[%s0 + $0x10] sm:$0xff]
    %v35 = vld [vmem:[%s0 + $0x18] sm:$0xff]
    %v36 = vld [vmem:[%s0 + $0x20] sm:$0xff]
    %v37 = vld [vmem:[%s0 + $0x28] sm:$0xff]
    %v38 = vld [vmem:[%s0 + $0x30] sm:$0xff]
    %v39 = vld [vmem:[%s0 + $0x38] sm:$0xff]
    %v40 = vld [vmem:[%s0 + $0x40] sm:$0xff]
    %v41 = vld [vmem:[%s0 + $0x48] sm:$0xff]
    %v42 = vld [vmem:[%s0 + $0x50] sm:$0xff]
    %v43 = vld [vmem:[%s0 + $0x58] sm:$0xff]
    %v44 = vld [vmem:[%s0 + $0x60] sm:$0xff]
    %v45 = vld [vmem:[%s0 + $0x68] sm:$0xff]
    %v46 = vld [vmem:[%s0 + $0x70] sm:$0xff]
    %v47 = vld [vmem:[%s0 + $0x78] sm:$0xff]
    %v48 = vld [vmem:[%s0 + $0x80] sm:$0xff]
    %v49 = vld [vmem:[%s0 + $0x88] sm:$0xff]
    %v50 = vld [vmem:[%s0 + $0x90] sm:$0xff]
    %v51 = vld [vmem:[%s0 + $0x98] sm:$0xff]
    %v52 = vld [vmem:[%s0 + $0xa0] sm:$0xff]
    %v53 = vld [vmem:[%s0 + $0xa8] sm:$0xff]
    %v54 = vld [vmem:[%s0 + $0xb0] sm:$0xff]
    %v55 = vld [vmem:[%s0 + $0xb8] sm:$0xff]
    %v56 = vld [vmem:[%s0 + $0xc0] sm:$0xff]
    %v57 = vld [vmem:[%s0 + $0xc8] sm:$0xff]
    %v58 = vld [vmem:[%s0 + $0xd0] sm:$0xff]
    %v59 = vld [vmem:[%s0 + $0xd8] sm:$0xff]
    %v60 = vld [vmem:[%s0 + $0xe0] sm:$0xff]
    %v61 = vld [vmem:[%s0 + $0xe8] sm:$0xff]
    %v62 = vld [vmem:[%s0 + $0xf0] sm:$0xff]
    %v63 = vld [vmem:[%s0 + $0xf8] sm:$0xff]
    %v64 = vld [vmem:[%s0 + $0x100] sm:$0xff]
    %v65 = vld [vmem:[%s0 + $0x108] sm:$0xff]
    %v66 = vld [vmem:[%s0 + $0x110] sm:$0xff]
    %v67 = vld [vmem:[%s0 + $0x118] sm:$0xff]
    %v68 = vld [vmem:[%s0 + $0x120] sm:$0xff]
    %v69 = vld [vmem:[%s0 + $0x128] sm:$0xff]
    %v70 = vld [vmem:[%s0 + $0x130] sm:$0xff]
    %v71 = vld [vmem:[%s0 + $0x138] sm:$0xff]
    %v72 = vld [vmem:[%s0 + $0x140] sm:$0xff]
    %v73 = vld [vmem:[%s0 + $0x148] sm:$0xff]
    %v74 = vld [vmem:[%s0 + $0x150] sm:$0xff]
    %v75 = vld [vmem:[%s0 + $0x158] sm:$0xff]
    %v76 = vld [vmem:[%s0 + $0x160] sm:$0xff]
    %v77 = vld [vmem:[%s0 + $0x168] sm:$0xff]
    %v78 = vld [vmem:[%s0 + $0x170] sm:$0xff]
    %v79 = vld [vmem:[%s0 + $0x178] sm:$0xff]
    %v80 = vld [vmem:[%s0 + $0x180] sm:$0xff]
    %v81 = vld [vmem:[%s0 + $0x188] sm:$0xff]
    %v82 = vld [vmem:[%s0 + $0x190] sm:$0xff]
    %v83 = vld [vmem:[%s0 + $0x198] sm:$0xff]
    %v84 = vld [vmem:[%s0 + $0x1a0] sm:$0xff]
    %v85 = vld [vmem:[%s0 + $0x1a8] sm:$0xff]
    %v86 = vld [vmem:[%s0 + $0x1b0] sm:$0xff]
    %v87 = vld [vmem:[%s0 + $0x1b8] sm:$0xff]
    %v88 = vld [vmem:[%s0 + $0x1c0] sm:$0xff]
    %v89 = vld [vmem:[%s0 + $0x1c8] sm:$0xff]
    %v90 = vld [vmem:[%s0 + $0x1d0] sm:$0xff]
    %v91 = vld [vmem:[%s0 + $0x1d8] sm:$0xff]
    %v92 = vld [vmem:[%s0 + $0x1e0] sm:$0xff]
    %v93 = vld [vmem:[%s0 + $0x1e8] sm:$0xff]
    %v94 = vld [vmem:[%s0 + $0x1f0] sm:$0xff]
    %v95 = vld [vmem:[%s0 + $0x1f8] sm:$0xff]
    %v96 = vlaneseq
    %v97 = vshrl.u32 %v96, 7
    %v98 = vsub.s32 0, %v97
    %v99 = vrot.slane %v31, %v98
    %100 = vmatprep.subr.mxu0 0.0
    %101 = vmatpush1.msra.mxu0 %v15
    %102 = vmatprep.subr.mxu0 0.0
    %103 = vmatpush1.msra.mxu0 %v16
    %104 = vmatprep.subr.mxu0 0.0
    %105 = vmatpush1.msra.mxu0 %v17
    %106 = vmatprep.subr.mxu0 0.0
    %107 = vmatpush1.msra.mxu0 %v18
    %108 = vmatprep.subr.mxu0 0.0
    %109 = vmatpush1.msra.mxu0 %v19
    %110 = vmatprep.subr.mxu0 0.0
    %111 = vmatpush1.msra.mxu0 %v20
    %112 = vmatprep.subr.mxu0 0.0
    %113 = vmatpush1.msra.mxu0 %v21
    %114 = vmatprep.subr.mxu0 0.0
    %115 = vmatpush1.msra.mxu0 %v22
    %116 = vmatprep.subr.mxu0 0.0
    %117 = vmatpush1.msra.mxu0 %v23
    %118 = vmatprep.subr.mxu0 0.0
    %119 = vmatpush1.msra.mxu0 %v24
    %120 = vmatprep.subr.mxu0 0.0
    %121 = vmatpush1.msra.mxu0 %v25
    %122 = vmatprep.subr.mxu0 0.0
    %123 = vmatpush1.msra.mxu0 %v26
    %124 = vmatprep.subr.mxu0 0.0
    %125 = vmatpush1.msra.mxu0 %v27
    %126 = vmatprep.subr.mxu0 0.0
    %127 = vmatpush1.msra.mxu0 %v28
    %128 = vmatprep.subr.mxu0 0.0
    %129 = vmatpush1.msra.mxu0 %v29
    %130 = vmatprep.subr.mxu0 0.0
    %131 = vmatpush1.msra.mxu0 %v30
    %132 = vmatprep.subr.mxu0 0.0
    %133 = vmatpush1.msra.mxu0 0.0
    %134 = vmatprep.subr.mxu0 0.0
    %135 = vmatpush1.msra.mxu0 0.0
    %136 = vmatprep.subr.mxu0 0.0
    %137 = vmatpush1.msra.mxu0 0.0
    %138 = vmatprep.subr.mxu0 0.0
    %139 = vmatpush1.msra.mxu0 0.0
    %140 = vmatprep.subr.mxu0 0.0
    %141 = vmatpush1.msra.mxu0 0.0
    %142 = vmatprep.subr.mxu0 0.0
    %143 = vmatpush1.msra.mxu0 0.0
    %144 = vmatprep.subr.mxu0 0.0
    %145 = vmatpush1.msra.mxu0 0.0
    %146 = vmatprep.subr.mxu0 0.0
    %147 = vmatpush1.msra.mxu0 0.0
    %148 = vmatprep.subr.mxu0 0.0
    %149 = vmatpush1.msra.mxu0 0.0
    %150 = vmatprep.subr.mxu0 0.0
    %151 = vmatpush1.msra.mxu0 0.0
    %152 = vmatprep.subr.mxu0 0.0
    %153 = vmatpush1.msra.mxu0 0.0
    %154 = vmatprep.subr.mxu0 0.0
    %155 = vmatpush1.msra.mxu0 0.0
    %156 = vmatprep.subr.mxu0 0.0
    %157 = vmatpush1.msra.mxu0 0.0
    %158 = vmatprep.subr.mxu0 0.0
    %159 = vmatpush1.msra.mxu0 0.0
    %160 = vmatprep.subr.mxu0 0.0
    %161 = vmatpush1.msra.mxu0 0.0
    %162 = vmatprep.subr.mxu0 0.0
    %163 = vmatpush1.msra.mxu0 0.0
    %164 = vmatprep.mubr.f32.mxu0 0.0
    %165 = vmatmul.mubr.f32.gmra.mrb[0].mxu0 %v32
    %v166 = vpop.f32.mrb[0].mxu0
    %v167 = vadd.f32 %v99, %v166
    %v168 = vpop.f32.mrb[0].mxu0
    %169 = vmatprep.mubr.f32.mxu0 0.0
    %170 = vmatmul.mubr.f32.gmra.mrb[0].mxu0 %v33
    %v171 = vpop.f32.mrb[0].mxu0
    %v172 = vadd.f32 %v99, %v171
    %v173 = vpop.f32.mrb[0].mxu0
    %174 = vmatprep.mubr.f32.mxu0 0.0
    %175 = vmatmul.mubr.f32.gmra.mrb[0].mxu0 %v34
    %v176 = vpop.f32.mrb[0].mxu0
    %v177 = vadd.f32 %v99, %v176
    %v178 = vpop.f32.mrb[0].mxu0
    %179 = vmatprep.mubr.f32.mxu0 0.0
    %180 = vmatmul.mubr.f32.gmra.mrb[0].mxu0 %v35
    %v181 = vpop.f32.mrb[0].mxu0
    %v182 = vadd.f32 %v99, %v181
    %v183 = vpop.f32.mrb[0].mxu0
    %184 = vmatprep.mubr.f32.mxu0 0.0
    %185 = vmatmul.mubr.f32.gmra.mrb[0].mxu0 %v36
    %v186 = vpop.f32.mrb[0].mxu0
    %v187 = vadd.f32 %v99, %v186
    %v188 = vpop.f32.mrb[0].mxu0
    %189 = vmatprep.mubr.f32.mxu0 0.0
    %190 = vmatmul.mubr.f32.gmra.mrb[0].mxu0 %v37
    %v191 = vpop.f32.mrb[0].mxu0
    %v192 = vadd.f32 %v99, %v191
    %v193 = vpop.f32.mrb[0].mxu0
    %194 = vmatprep.mubr.f32.mxu0 0.0
    %195 = vmatmul.mubr.f32.gmra.mrb[0].mxu0 %v38
    %v196 = vpop.f32.mrb[0].mxu0
    %v197 = vadd.f32 %v99, %v196
    %v198 = vpop.f32.mrb[0].mxu0
    %199 = vmatprep.mubr.f32.mxu0 0.0
    %200 = vmatmul.mubr.f32.gmra.mrb[0].mxu0 %v39
    %v201 = vpop.f32.mrb[0].mxu0
    %v202 = vadd.f32 %v99, %v201
    %v203 = vpop.f32.mrb[0].mxu0
    %204 = vmatprep.mubr.f32.mxu0 0.0
    %205 = vmatmul.mubr.f32.gmra.mrb[0].mxu0 %v40
    %v206 = vpop.f32.mrb[0].mxu0
    %v207 = vadd.f32 %v99, %v206
    %v208 = vpop.f32.mrb[0].mxu0
    %209 = vmatprep.mubr.f32.mxu0 0.0
    %210 = vmatmul.mubr.f32.gmra.mrb[0].mxu0 %v41
    %v211 = vpop.f32.mrb[0].mxu0
    %v212 = vadd.f32 %v99, %v211
    %v213 = vpop.f32.mrb[0].mxu0
    %214 = vmatprep.mubr.f32.mxu0 0.0
    %215 = vmatmul.mubr.f32.gmra.mrb[0].mxu0 %v42
    %v216 = vpop.f32.mrb[0].mxu0
    %v217 = vadd.f32 %v99, %v216
    %v218 = vpop.f32.mrb[0].mxu0
    %219 = vmatprep.mubr.f32.mxu0 0.0
    %220 = vmatmul.mubr.f32.gmra.mrb[0].mxu0 %v43
    %v221 = vpop.f32.mrb[0].mxu0
    %v222 = vadd.f32 %v99, %v221
    %v223 = vpop.f32.mrb[0].mxu0
    %224 = vmatprep.mubr.f32.mxu0 0.0
    %225 = vmatmul.mubr.f32.gmra.mrb[0].mxu0 %v44
    %v226 = vpop.f32.mrb[0].mxu0
    %v227 = vadd.f32 %v99, %v226
    %v228 = vpop.f32.mrb[0].mxu0
    %229 = vmatprep.mubr.f32.mxu0 0.0
    %230 = vmatmul.mubr.f32.gmra.mrb[0].mxu0 %v45
    %v231 = vpop.f32.mrb[0].mxu0
    %v232 = vadd.f32 %v99, %v231
    %v233 = vpop.f32.mrb[0].mxu0
    %234 = vmatprep.mubr.f32.mxu0 0.0
    %235 = vmatmul.mubr.f32.gmra.mrb[0].mxu0 %v46
    %v236 = vpop.f32.mrb[0].mxu0
    %v237 = vadd.f32 %v99, %v236
    %v238 = vpop.f32.mrb[0].mxu0
    %239 = vmatprep.mubr.f32.mxu0 0.0
    %240 = vmatmul.mubr.f32.gmra.mrb[0].mxu0 %v47
    %v241 = vpop.f32.mrb[0].mxu0
    %v242 = vadd.f32 %v99, %v241
    %v243 = vpop.f32.mrb[0].mxu0
    %244 = vmatprep.mubr.f32.mxu0 0.0
    %245 = vmatmul.mubr.f32.gmra.mrb[0].mxu0 %v48
    %v246 = vpop.f32.mrb[0].mxu0
    %v247 = vadd.f32 %v99, %v246
    %v248 = vpop.f32.mrb[0].mxu0
    %249 = vmatprep.mubr.f32.mxu0 0.0
    %250 = vmatmul.mubr.f32.gmra.mrb[0].mxu0 %v49
    %v251 = vpop.f32.mrb[0].mxu0
    %v252 = vadd.f32 %v99, %v251
    %v253 = vpop.f32.mrb[0].mxu0
    %254 = vmatprep.mubr.f32.mxu0 0.0
    %255 = vmatmul.mubr.f32.gmra.mrb[0].mxu0 %v50
    %v256 = vpop.f32.mrb[0].mxu0
    %v257 = vadd.f32 %v99, %v256
    %v258 = vpop.f32.mrb[0].mxu0
    %259 = vmatprep.mubr.f32.mxu0 0.0
    %260 = vmatmul.mubr.f32.gmra.mrb[0].mxu0 %v51
    %v261 = vpop.f32.mrb[0].mxu0
    %v262 = vadd.f32 %v99, %v261
    %v263 = vpop.f32.mrb[0].mxu0
    %264 = vmatprep.mubr.f32.mxu0 0.0
    %265 = vmatmul.mubr.f32.gmra.mrb[0].mxu0 %v52
    %v266 = vpop.f32.mrb[0].mxu0
    %v267 = vadd.f32 %v99, %v266
    %v268 = vpop.f32.mrb[0].mxu0
    %269 = vmatprep.mubr.f32.mxu0 0.0
    %270 = vmatmul.mubr.f32.gmra.mrb[0].mxu0 %v53
    %v271 = vpop.f32.mrb[0].mxu0
    %v272 = vadd.f32 %v99, %v271
    %v273 = vpop.f32.mrb[0].mxu0
    %274 = vmatprep.mubr.f32.mxu0 0.0
    %275 = vmatmul.mubr.f32.gmra.mrb[0].mxu0 %v54
    %v276 = vpop.f32.mrb[0].mxu0
    %v277 = vadd.f32 %v99, %v276
    %v278 = vpop.f32.mrb[0].mxu0
    %279 = vmatprep.mubr.f32.mxu0 0.0
    %280 = vmatmul.mubr.f32.gmra.mrb[0].mxu0 %v55
    %v281 = vpop.f32.mrb[0].mxu0
    %v282 = vadd.f32 %v99, %v281
    %v283 = vpop.f32.mrb[0].mxu0
    %284 = vmatprep.mubr.f32.mxu0 0.0
    %285 = vmatmul.mubr.f32.gmra.mrb[0].mxu0 %v56
    %v286 = vpop.f32.mrb[0].mxu0
    %v287 = vadd.f32 %v99, %v286
    %v288 = vpop.f32.mrb[0].mxu0
    %289 = vmatprep.mubr.f32.mxu0 0.0
    %290 = vmatmul.mubr.f32.gmra.mrb[0].mxu0 %v57
    %v291 = vpop.f32.mrb[0].mxu0
    %v292 = vadd.f32 %v99, %v291
    %v293 = vpop.f32.mrb[0].mxu0
    %294 = vmatprep.mubr.f32.mxu0 0.0
    %295 = vmatmul.mubr.f32.gmra.mrb[0].mxu0 %v58
    %v296 = vpop.f32.mrb[0].mxu0
    %v297 = vadd.f32 %v99, %v296
    %v298 = vpop.f32.mrb[0].mxu0
    %299 = vmatprep.mubr.f32.mxu0 0.0
    %300 = vmatmul.mubr.f32.gmra.mrb[0].mxu0 %v59
    %v301 = vpop.f32.mrb[0].mxu0
    %v302 = vadd.f32 %v99, %v301
    %v303 = vpop.f32.mrb[0].mxu0
    %304 = vmatprep.mubr.f32.mxu0 0.0
    %305 = vmatmul.mubr.f32.gmra.mrb[0].mxu0 %v60
    %v306 = vpop.f32.mrb[0].mxu0
    %v307 = vadd.f32 %v99, %v306
    %v308 = vpop.f32.mrb[0].mxu0
    %309 = vmatprep.mubr.f32.mxu0 0.0
    %310 = vmatmul.mubr.f32.gmra.mrb[0].mxu0 %v61
    %v311 = vpop.f32.mrb[0].mxu0
    %v312 = vadd.f32 %v99, %v311
    %v313 = vpop.f32.mrb[0].mxu0
    %314 = vmatprep.mubr.f32.mxu0 0.0
    %315 = vmatmul.mubr.f32.gmra.mrb[0].mxu0 %v62
    %v316 = vpop.f32.mrb[0].mxu0
    %v317 = vadd.f32 %v99, %v316
    %v318 = vpop.f32.mrb[0].mxu0
    %319 = vmatprep.mubr.f32.mxu0 0.0
    %320 = vmatmul.mubr.f32.gmra.mrb[0].mxu0 %v63
    %v321 = vpop.f32.mrb[0].mxu0
    %v322 = vadd.f32 %v99, %v321
    %v323 = vpop.f32.mrb[0].mxu0
    %324 = vmatprep.mubr.f32.mxu0 0.0
    %325 = vmatmul.mubr.f32.gmra.mrb[0].mxu0 %v64
    %v326 = vpop.f32.mrb[0].mxu0
    %v327 = vadd.f32 %v99, %v326
    %v328 = vpop.f32.mrb[0].mxu0
    %329 = vmatprep.mubr.f32.mxu0 0.0
    %330 = vmatmul.mubr.f32.gmra.mrb[0].mxu0 %v65
    %v331 = vpop.f32.mrb[0].mxu0
    %v332 = vadd.f32 %v99, %v331
    %v333 = vpop.f32.mrb[0].mxu0
    %334 = vmatprep.mubr.f32.mxu0 0.0
    %335 = vmatmul.mubr.f32.gmra.mrb[0].mxu0 %v66
    %v336 = vpop.f32.mrb[0].mxu0
    %v337 = vadd.f32 %v99, %v336
    %v338 = vpop.f32.mrb[0].mxu0
    %339 = vmatprep.mubr.f32.mxu0 0.0
    %340 = vmatmul.mubr.f32.gmra.mrb[0].mxu0 %v67
    %v341 = vpop.f32.mrb[0].mxu0
    %v342 = vadd.f32 %v99, %v341
    %v343 = vpop.f32.mrb[0].mxu0
    %344 = vmatprep.mubr.f32.mxu0 0.0
    %345 = vmatmul.mubr.f32.gmra.mrb[0].mxu0 %v68
    %v346 = vpop.f32.mrb[0].mxu0
    %v347 = vadd.f32 %v99, %v346
    %v348 = vpop.f32.mrb[0].mxu0
    %349 = vmatprep.mubr.f32.mxu0 0.0
    %350 = vmatmul.mubr.f32.gmra.mrb[0].mxu0 %v69
    %v351 = vpop.f32.mrb[0].mxu0
    %v352 = vadd.f32 %v99, %v351
    %v353 = vpop.f32.mrb[0].mxu0
    %354 = vmatprep.mubr.f32.mxu0 0.0
    %355 = vmatmul.mubr.f32.gmra.mrb[0].mxu0 %v70
    %v356 = vpop.f32.mrb[0].mxu0
    %v357 = vadd.f32 %v99, %v356
    %v358 = vpop.f32.mrb[0].mxu0
    %359 = vmatprep.mubr.f32.mxu0 0.0
    %360 = vmatmul.mubr.f32.gmra.mrb[0].mxu0 %v71
    %v361 = vpop.f32.mrb[0].mxu0
    %v362 = vadd.f32 %v99, %v361
    %v363 = vpop.f32.mrb[0].mxu0
    %364 = vmatprep.mubr.f32.mxu0 0.0
    %365 = vmatmul.mubr.f32.gmra.mrb[0].mxu0 %v72
    %v366 = vpop.f32.mrb[0].mxu0
    %v367 = vadd.f32 %v99, %v366
    %v368 = vpop.f32.mrb[0].mxu0
    %369 = vmatprep.mubr.f32.mxu0 0.0
    %370 = vmatmul.mubr.f32.gmra.mrb[0].mxu0 %v73
    %v371 = vpop.f32.mrb[0].mxu0
    %v372 = vadd.f32 %v99, %v371
    %v373 = vpop.f32.mrb[0].mxu0
    %374 = vmatprep.mubr.f32.mxu0 0.0
    %375 = vmatmul.mubr.f32.gmra.mrb[0].mxu0 %v74
    %v376 = vpop.f32.mrb[0].mxu0
    %v377 = vadd.f32 %v99, %v376
    %v378 = vpop.f32.mrb[0].mxu0
    %379 = vmatprep.mubr.f32.mxu0 0.0
    %380 = vmatmul.mubr.f32.gmra.mrb[0].mxu0 %v75
    %v381 = vpop.f32.mrb[0].mxu0
    %v382 = vadd.f32 %v99, %v381
    %v383 = vpop.f32.mrb[0].mxu0
    %384 = vmatprep.mubr.f32.mxu0 0.0
    %385 = vmatmul.mubr.f32.gmra.mrb[0].mxu0 %v76
    %v386 = vpop.f32.mrb[0].mxu0
    %v387 = vadd.f32 %v99, %v386
    %v388 = vpop.f32.mrb[0].mxu0
    %389 = vmatprep.mubr.f32.mxu0 0.0
    %390 = vmatmul.mubr.f32.gmra.mrb[0].mxu0 %v77
    %v391 = vpop.f32.mrb[0].mxu0
    %v392 = vadd.f32 %v99, %v391
    %v393 = vpop.f32.mrb[0].mxu0
    %394 = vmatprep.mubr.f32.mxu0 0.0
    %395 = vmatmul.mubr.f32.gmra.mrb[0].mxu0 %v78
    %v396 = vpop.f32.mrb[0].mxu0
    %v397 = vadd.f32 %v99, %v396
    %v398 = vpop.f32.mrb[0].mxu0
    %399 = vmatprep.mubr.f32.mxu0 0.0
    %400 = vmatmul.mubr.f32.gmra.mrb[0].mxu0 %v79
    %v401 = vpop.f32.mrb[0].mxu0
    %v402 = vadd.f32 %v99, %v401
    %v403 = vpop.f32.mrb[0].mxu0
    %404 = vmatprep.mubr.f32.mxu0 0.0
    %405 = vmatmul.mubr.f32.gmra.mrb[0].mxu0 %v80
    %v406 = vpop.f32.mrb[0].mxu0
    %v407 = vadd.f32 %v99, %v406
    %v408 = vpop.f32.mrb[0].mxu0
    %409 = vmatprep.mubr.f32.mxu0 0.0
    %410 = vmatmul.mubr.f32.gmra.mrb[0].mxu0 %v81
    %v411 = vpop.f32.mrb[0].mxu0
    %v412 = vadd.f32 %v99, %v411
    %v413 = vpop.f32.mrb[0].mxu0
    %414 = vmatprep.mubr.f32.mxu0 0.0
    %415 = vmatmul.mubr.f32.gmra.mrb[0].mxu0 %v82
    %v416 = vpop.f32.mrb[0].mxu0
    %v417 = vadd.f32 %v99, %v416
    %v418 = vpop.f32.mrb[0].mxu0
    %419 = vmatprep.mubr.f32.mxu0 0.0
    %420 = vmatmul.mubr.f32.gmra.mrb[0].mxu0 %v83
    %v421 = vpop.f32.mrb[0].mxu0
    %v422 = vadd.f32 %v99, %v421
    %v423 = vpop.f32.mrb[0].mxu0
    %424 = vmatprep.mubr.f32.mxu0 0.0
    %425 = vmatmul.mubr.f32.gmra.mrb[0].mxu0 %v84
    %v426 = vpop.f32.mrb[0].mxu0
    %v427 = vadd.f32 %v99, %v426
    %v428 = vpop.f32.mrb[0].mxu0
    %429 = vmatprep.mubr.f32.mxu0 0.0
    %430 = vmatmul.mubr.f32.gmra.mrb[0].mxu0 %v85
    %v431 = vpop.f32.mrb[0].mxu0
    %v432 = vadd.f32 %v99, %v431
    %v433 = vpop.f32.mrb[0].mxu0
    %434 = vmatprep.mubr.f32.mxu0 0.0
    %435 = vmatmul.mubr.f32.gmra.mrb[0].mxu0 %v86
    %v436 = vpop.f32.mrb[0].mxu0
    %v437 = vadd.f32 %v99, %v436
    %v438 = vpop.f32.mrb[0].mxu0
    %439 = vmatprep.mubr.f32.mxu0 0.0
    %440 = vmatmul.mubr.f32.gmra.mrb[0].mxu0 %v87
    %v441 = vpop.f32.mrb[0].mxu0
    %v442 = vadd.f32 %v99, %v441
    %v443 = vpop.f32.mrb[0].mxu0
    %444 = vmatprep.mubr.f32.mxu0 0.0
    %445 = vmatmul.mubr.f32.gmra.mrb[0].mxu0 %v88
    %v446 = vpop.f32.mrb[0].mxu0
    %v447 = vadd.f32 %v99, %v446
    %v448 = vpop.f32.mrb[0].mxu0
    %449 = vmatprep.mubr.f32.mxu0 0.0
    %450 = vmatmul.mubr.f32.gmra.mrb[0].mxu0 %v89
    %v451 = vpop.f32.mrb[0].mxu0
    %v452 = vadd.f32 %v99, %v451
    %v453 = vpop.f32.mrb[0].mxu0
    %454 = vmatprep.mubr.f32.mxu0 0.0
    %455 = vmatmul.mubr.f32.gmra.mrb[0].mxu0 %v90
    %v456 = vpop.f32.mrb[0].mxu0
    %v457 = vadd.f32 %v99, %v456
    %v458 = vpop.f32.mrb[0].mxu0
    %459 = vmatprep.mubr.f32.mxu0 0.0
    %460 = vmatmul.mubr.f32.gmra.mrb[0].mxu0 %v91
    %v461 = vpop.f32.mrb[0].mxu0
    %v462 = vadd.f32 %v99, %v461
    %v463 = vpop.f32.mrb[0].mxu0
    %464 = vmatprep.mubr.f32.mxu0 0.0
    %465 = vmatmul.mubr.f32.gmra.mrb[0].mxu0 %v92
    %v466 = vpop.f32.mrb[0].mxu0
    %v467 = vadd.f32 %v99, %v466
    %v468 = vpop.f32.mrb[0].mxu0
    %469 = vmatprep.mubr.f32.mxu0 0.0
    %470 = vmatmul.mubr.f32.gmra.mrb[0].mxu0 %v93
    %v471 = vpop.f32.mrb[0].mxu0
    %v472 = vadd.f32 %v99, %v471
    %v473 = vpop.f32.mrb[0].mxu0
    %474 = vmatprep.mubr.f32.mxu0 0.0
    %475 = vmatmul.mubr.f32.gmra.mrb[0].mxu0 %v94
    %v476 = vpop.f32.mrb[0].mxu0
    %v477 = vadd.f32 %v99, %v476
    %v478 = vpop.f32.mrb[0].mxu0
    %479 = vmatprep.mubr.f32.mxu0 0.0
    %480 = vmatmul.mubr.f32.gmra.mrb[0].mxu0 %v95
    %v481 = vpop.f32.mrb[0].mxu0
    %v482 = vadd.f32 %v99, %v481
    %v483 = vpop.f32.mrb[0].mxu0
    %484 = vdwg.mxu0
    %v485 = vmax.f32 %v167, 0.0
    %v486 = vmax.f32 %v172, 0.0
    %v487 = vmax.f32 %v177, 0.0
    %v488 = vmax.f32 %v182, 0.0
    %v489 = vmax.f32 %v187, 0.0
    %v490 = vmax.f32 %v192, 0.0
    %v491 = vmax.f32 %v197, 0.0
    %v492 = vmax.f32 %v202, 0.0
    %v493 = vmax.f32 %v207, 0.0
    %v494 = vmax.f32 %v212, 0.0
    %v495 = vmax.f32 %v217, 0.0
    %v496 = vmax.f32 %v222, 0.0
    %v497 = vmax.f32 %v227, 0.0
    %v498 = vmax.f32 %v232, 0.0
    %v499 = vmax.f32 %v237, 0.0
    %v500 = vmax.f32 %v242, 0.0
    %v501 = vmax.f32 %v247, 0.0
    %v502 = vmax.f32 %v252, 0.0
    %v503 = vmax.f32 %v257, 0.0
    %v504 = vmax.f32 %v262, 0.0
    %v505 = vmax.f32 %v267, 0.0
    %v506 = vmax.f32 %v272, 0.0
    %v507 = vmax.f32 %v277, 0.0
    %v508 = vmax.f32 %v282, 0.0
    %v509 = vmax.f32 %v287, 0.0
    %v510 = vmax.f32 %v292, 0.0
    %v511 = vmax.f32 %v297, 0.0
    %v512 = vmax.f32 %v302, 0.0
    %v513 = vmax.f32 %v307, 0.0
    %v514 = vmax.f32 %v312, 0.0
    %v515 = vmax.f32 %v317, 0.0
    %v516 = vmax.f32 %v322, 0.0
    %v517 = vmax.f32 %v327, 0.0
    %v518 = vmax.f32 %v332, 0.0
    %v519 = vmax.f32 %v337, 0.0
    %v520 = vmax.f32 %v342, 0.0
    %v521 = vmax.f32 %v347, 0.0
    %v522 = vmax.f32 %v352, 0.0
    %v523 = vmax.f32 %v357, 0.0
    %v524 = vmax.f32 %v362, 0.0
    %v525 = vmax.f32 %v367, 0.0
    %v526 = vmax.f32 %v372, 0.0
    %v527 = vmax.f32 %v377, 0.0
    %v528 = vmax.f32 %v382, 0.0
    %v529 = vmax.f32 %v387, 0.0
    %v530 = vmax.f32 %v392, 0.0
    %v531 = vmax.f32 %v397, 0.0
    %v532 = vmax.f32 %v402, 0.0
    %v533 = vmax.f32 %v407, 0.0
    %v534 = vmax.f32 %v412, 0.0
    %v535 = vmax.f32 %v417, 0.0
    %v536 = vmax.f32 %v422, 0.0
    %v537 = vmax.f32 %v427, 0.0
    %v538 = vmax.f32 %v432, 0.0
    %v539 = vmax.f32 %v437, 0.0
    %v540 = vmax.f32 %v442, 0.0
    %v541 = vmax.f32 %v447, 0.0
    %v542 = vmax.f32 %v452, 0.0
    %v543 = vmax.f32 %v457, 0.0
    %v544 = vmax.f32 %v462, 0.0
    %v545 = vmax.f32 %v467, 0.0
    %v546 = vmax.f32 %v472, 0.0
    %v547 = vmax.f32 %v477, 0.0
    %v548 = vmax.f32 %v482, 0.0
    %v549 = vlaneseq
    %v550 = vshrl.u32 %v549, 7
    %v551 = vlaneseq
    %v552 = vand.u32 %v551, 127
    %v553 = vadd.s32 %v552, 128
    %v554 = vadd.s32 %v552, 256
    %v555 = vadd.s32 %v552, 384
    %v556 = vmul.u32 %v550, 256
    %vm557 = vcmp.ge.s32.totalorder %v552, %v556
    %vm558 = vcmp.ge.s32.totalorder %v553, %v556
    %vm559 = vcmp.ge.s32.totalorder %v554, %v556
    %vm560 = vcmp.ge.s32.totalorder %v555, %v556
    %v561 = vadd.s32 %v550, 1
    %v562 = vmul.u32 %v561, 256
    %vm563 = vcmp.lt.s32.totalorder %v552, %v562
    %vm564 = vcmp.lt.s32.totalorder %v553, %v562
    %vm565 = vcmp.lt.s32.totalorder %v554, %v562
    %vm566 = vcmp.lt.s32.totalorder %v555, %v562
    %vm567 = vmand %vm557, %vm563
    %vm568 = vmand %vm558, %vm564
    %vm569 = vmand %vm559, %vm565
    %vm570 = vmand %vm560, %vm566
    %v571 = vsel %vm567, 0.00390625, 0.0
    %v572 = vsel %vm568, 0.00390625, 0.0
    %v573 = vsel %vm569, 0.00390625, 0.0
    %v574 = vsel %vm570, 0.00390625, 0.0
    %575 = vmatprep.subr.mxu0 0.0
    %576 = vmatpush1.msra.mxu0 %v485
    %577 = vmatprep.subr.mxu0 0.0
    %578 = vmatpush1.msra.mxu0 %v486
    %579 = vmatprep.subr.mxu0 0.0
    %580 = vmatpush1.msra.mxu0 %v487
    %581 = vmatprep.subr.mxu0 0.0
    %582 = vmatpush1.msra.mxu0 %v488
    %583 = vmatprep.subr.mxu0 0.0
    %584 = vmatpush1.msra.mxu0 %v489
    %585 = vmatprep.subr.mxu0 0.0
    %586 = vmatpush1.msra.mxu0 %v490
    %587 = vmatprep.subr.mxu0 0.0
    %588 = vmatpush1.msra.mxu0 %v491
    %589 = vmatprep.subr.mxu0 0.0
    %590 = vmatpush1.msra.mxu0 %v492
    %591 = vmatprep.subr.mxu0 0.0
    %592 = vmatpush1.msra.mxu0 %v493
    %593 = vmatprep.subr.mxu0 0.0
    %594 = vmatpush1.msra.mxu0 %v494
    %595 = vmatprep.subr.mxu0 0.0
    %596 = vmatpush1.msra.mxu0 %v495
    %597 = vmatprep.subr.mxu0 0.0
    %598 = vmatpush1.msra.mxu0 %v496
    %599 = vmatprep.subr.mxu0 0.0
    %600 = vmatpush1.msra.mxu0 %v497
    %601 = vmatprep.subr.mxu0 0.0
    %602 = vmatpush1.msra.mxu0 %v498
    %603 = vmatprep.subr.mxu0 0.0
    %604 = vmatpush1.msra.mxu0 %v499
    %605 = vmatprep.subr.mxu0 0.0
    %606 = vmatpush1.msra.mxu0 %v500
    %607 = vmatprep.subr.mxu0 0.0
    %608 = vmatpush1.msra.mxu0 %v501
    %609 = vmatprep.subr.mxu0 0.0
    %610 = vmatpush1.msra.mxu0 %v502
    %611 = vmatprep.subr.mxu0 0.0
    %612 = vmatpush1.msra.mxu0 %v503
    %613 = vmatprep.subr.mxu0 0.0
    %614 = vmatpush1.msra.mxu0 %v504
    %615 = vmatprep.subr.mxu0 0.0
    %616 = vmatpush1.msra.mxu0 %v505
    %617 = vmatprep.subr.mxu0 0.0
    %618 = vmatpush1.msra.mxu0 %v506
    %619 = vmatprep.subr.mxu0 0.0
    %620 = vmatpush1.msra.mxu0 %v507
    %621 = vmatprep.subr.mxu0 0.0
    %622 = vmatpush1.msra.mxu0 %v508
    %623 = vmatprep.subr.mxu0 0.0
    %624 = vmatpush1.msra.mxu0 %v509
    %625 = vmatprep.subr.mxu0 0.0
    %626 = vmatpush1.msra.mxu0 %v510
    %627 = vmatprep.subr.mxu0 0.0
    %628 = vmatpush1.msra.mxu0 %v511
    %629 = vmatprep.subr.mxu0 0.0
    %630 = vmatpush1.msra.mxu0 %v512
    %631 = vmatprep.subr.mxu0 0.0
    %632 = vmatpush1.msra.mxu0 %v513
    %633 = vmatprep.subr.mxu0 0.0
    %634 = vmatpush1.msra.mxu0 %v514
    %635 = vmatprep.subr.mxu0 0.0
    %636 = vmatpush1.msra.mxu0 %v515
    %637 = vmatprep.subr.mxu0 0.0
    %638 = vmatpush1.msra.mxu0 %v516
    %639 = vmatprep.mubr.f32.mxu0 %v572
    %640 = vmatmul.mubr.f32.gmra.mrb[0].mxu0 %v571
    %v641 = vpop.f32.mrb[0].mxu0
    %v642 = vadd.f32 0.0, %v641
    %v643 = vpop.f32.mrb[0].mxu0
    %644 = vdwg.mxu0
    %645 = vmatprep.subr.mxu0 0.0
    %646 = vmatpush1.msra.mxu0 %v517
    %647 = vmatprep.subr.mxu0 0.0
    %648 = vmatpush1.msra.mxu0 %v518
    %649 = vmatprep.subr.mxu0 0.0
    %650 = vmatpush1.msra.mxu0 %v519
    %651 = vmatprep.subr.mxu0 0.0
    %652 = vmatpush1.msra.mxu0 %v520
    %653 = vmatprep.subr.mxu0 0.0
    %654 = vmatpush1.msra.mxu0 %v521
    %655 = vmatprep.subr.mxu0 0.0
    %656 = vmatpush1.msra.mxu0 %v522
    %657 = vmatprep.subr.mxu0 0.0
    %658 = vmatpush1.msra.mxu0 %v523
    %659 = vmatprep.subr.mxu0 0.0
    %660 = vmatpush1.msra.mxu0 %v524
    %661 = vmatprep.subr.mxu0 0.0
    %662 = vmatpush1.msra.mxu0 %v525
    %663 = vmatprep.subr.mxu0 0.0
    %664 = vmatpush1.msra.mxu0 %v526
    %665 = vmatprep.subr.mxu0 0.0
    %666 = vmatpush1.msra.mxu0 %v527
    %667 = vmatprep.subr.mxu0 0.0
    %668 = vmatpush1.msra.mxu0 %v528
    %669 = vmatprep.subr.mxu0 0.0
    %670 = vmatpush1.msra.mxu0 %v529
    %671 = vmatprep.subr.mxu0 0.0
    %672 = vmatpush1.msra.mxu0 %v530
    %673 = vmatprep.subr.mxu0 0.0
    %674 = vmatpush1.msra.mxu0 %v531
    %675 = vmatprep.subr.mxu0 0.0
    %676 = vmatpush1.msra.mxu0 %v532
    %677 = vmatprep.subr.mxu0 0.0
    %678 = vmatpush1.msra.mxu0 %v533
    %679 = vmatprep.subr.mxu0 0.0
    %680 = vmatpush1.msra.mxu0 %v534
    %681 = vmatprep.subr.mxu0 0.0
    %682 = vmatpush1.msra.mxu0 %v535
    %683 = vmatprep.subr.mxu0 0.0
    %684 = vmatpush1.msra.mxu0 %v536
    %685 = vmatprep.subr.mxu0 0.0
    %686 = vmatpush1.msra.mxu0 %v537
    %687 = vmatprep.subr.mxu0 0.0
    %688 = vmatpush1.msra.mxu0 %v538
    %689 = vmatprep.subr.mxu0 0.0
    %690 = vmatpush1.msra.mxu0 %v539
    %691 = vmatprep.subr.mxu0 0.0
    %692 = vmatpush1.msra.mxu0 %v540
    %693 = vmatprep.subr.mxu0 0.0
    %694 = vmatpush1.msra.mxu0 %v541
    %695 = vmatprep.subr.mxu0 0.0
    %696 = vmatpush1.msra.mxu0 %v542
    %697 = vmatprep.subr.mxu0 0.0
    %698 = vmatpush1.msra.mxu0 %v543
    %699 = vmatprep.subr.mxu0 0.0
    %700 = vmatpush1.msra.mxu0 %v544
    %701 = vmatprep.subr.mxu0 0.0
    %702 = vmatpush1.msra.mxu0 %v545
    %703 = vmatprep.subr.mxu0 0.0
    %704 = vmatpush1.msra.mxu0 %v546
    %705 = vmatprep.subr.mxu0 0.0
    %706 = vmatpush1.msra.mxu0 %v547
    %707 = vmatprep.subr.mxu0 0.0
    %708 = vmatpush1.msra.mxu0 %v548
    %709 = vmatprep.mubr.f32.mxu0 %v574
    %710 = vmatmul.mubr.f32.gmra.mrb[0].mxu0 %v573
    %v711 = vpop.f32.mrb[0].mxu0
    %v712 = vadd.f32 %v642, %v711
    %v713 = vpop.f32.mrb[0].mxu0
    %714 = vdwg.mxu0
    %v715 = vld [vmem:[%s2 + $0x8] sm:$0xff]
    %v716 = vld [vmem:[%s2 + $0x10] sm:$0x1]
    %v717 = vld [vmem:[%s1] sm:$0x3]
    %v718 = vlaneseq
    %v719 = vshrl.u32 %v718, 7
    %v720 = vsub.s32 0, %v719
    %v721 = vrot.slane %v716, %v720
    %vm722 = vcmask 64512
    %v724 = vsel %vm722, %v717, 0
    %726 = vmatprep.subr.mxu0 0.0
    %727 = vmatpush1.msra.mxu0 %v715
    %728 = vmatprep.subr.mxu0 0.0
    %729 = vmatpush1.msra.mxu0 0.0
    %730 = vmatprep.subr.mxu0 0.0
    %731 = vmatpush1.msra.mxu0 0.0
    %732 = vmatprep.subr.mxu0 0.0
    %733 = vmatpush1.msra.mxu0 0.0
    %734 = vmatprep.subr.mxu0 0.0
    %735 = vmatpush1.msra.mxu0 0.0
    %736 = vmatprep.subr.mxu0 0.0
    %737 = vmatpush1.msra.mxu0 0.0
    %738 = vmatprep.subr.mxu0 0.0
    %739 = vmatpush1.msra.mxu0 0.0
    %740 = vmatprep.subr.mxu0 0.0
    %741 = vmatpush1.msra.mxu0 0.0
    %742 = vmatprep.subr.mxu0 0.0
    %743 = vmatpush1.msra.mxu0 0.0
    %744 = vmatprep.subr.mxu0 0.0
    %745 = vmatpush1.msra.mxu0 0.0
    %746 = vmatprep.subr.mxu0 0.0
    %747 = vmatpush1.msra.mxu0 0.0
    %748 = vmatprep.subr.mxu0 0.0
    %749 = vmatpush1.msra.mxu0 0.0
    %750 = vmatprep.subr.mxu0 0.0
    %751 = vmatpush1.msra.mxu0 0.0
    %752 = vmatprep.subr.mxu0 0.0
    %753 = vmatpush1.msra.mxu0 0.0
    %754 = vmatprep.subr.mxu0 0.0
    %755 = vmatpush1.msra.mxu0 0.0
    %756 = vmatprep.subr.mxu0 0.0
    %757 = vmatpush1.msra.mxu0 0.0
    %758 = vmatprep.subr.mxu0 0.0
    %759 = vmatpush1.msra.mxu0 0.0
    %760 = vmatprep.subr.mxu0 0.0
    %761 = vmatpush1.msra.mxu0 0.0
    %762 = vmatprep.subr.mxu0 0.0
    %763 = vmatpush1.msra.mxu0 0.0
    %764 = vmatprep.subr.mxu0 0.0
    %765 = vmatpush1.msra.mxu0 0.0
    %766 = vmatprep.subr.mxu0 0.0
    %767 = vmatpush1.msra.mxu0 0.0
    %768 = vmatprep.subr.mxu0 0.0
    %769 = vmatpush1.msra.mxu0 0.0
    %770 = vmatprep.subr.mxu0 0.0
    %771 = vmatpush1.msra.mxu0 0.0
    %772 = vmatprep.subr.mxu0 0.0
    %773 = vmatpush1.msra.mxu0 0.0
    %774 = vmatprep.subr.mxu0 0.0
    %775 = vmatpush1.msra.mxu0 0.0
    %776 = vmatprep.subr.mxu0 0.0
    %777 = vmatpush1.msra.mxu0 0.0
    %778 = vmatprep.subr.mxu0 0.0
    %779 = vmatpush1.msra.mxu0 0.0
    %780 = vmatprep.subr.mxu0 0.0
    %781 = vmatpush1.msra.mxu0 0.0
    %782 = vmatprep.subr.mxu0 0.0
    %783 = vmatpush1.msra.mxu0 0.0
    %784 = vmatprep.subr.mxu0 0.0
    %785 = vmatpush1.msra.mxu0 0.0
    %786 = vmatprep.subr.mxu0 0.0
    %787 = vmatpush1.msra.mxu0 0.0
    %788 = vmatprep.subr.mxu0 0.0
    %789 = vmatpush1.msra.mxu0 0.0
    %790 = vmatprep.mubr.f32.mxu0 0.0
    %791 = vmatmul.mubr.f32.gmra.mrb[0].mxu0 %v724
    %v792 = vpop.f32.mrb[0].mxu0
    %v793 = vadd.f32 %v721, %v792
    %v794 = vpop.f32.mrb[0].mxu0
    %795 = vdwg.mxu0
    %v796 = vmax.f32 %v793, 0.0
    %v797 = vld [vmem:[%s2 + $0x50] sm:$0xff]
    %v798 = vld [vmem:[%s2 + $0x58] sm:$0xff]
    %v799 = vld [vmem:[%s2 + $0x60] sm:$0xff]
    %v800 = vld [vmem:[%s2 + $0x68] sm:$0xff]
    %v801 = vld [vmem:[%s2 + $0x70] sm:$0xff]
    %v802 = vld [vmem:[%s2 + $0x78] sm:$0xff]
    %v803 = vld [vmem:[%s2 + $0x80] sm:$0xff]
    %v804 = vld [vmem:[%s2 + $0x88] sm:$0xff]
    %v805 = vld [vmem:[%s2 + $0x90] sm:$0xff]
    %v806 = vld [vmem:[%s2 + $0x98] sm:$0xff]
    %v807 = vld [vmem:[%s2 + $0xa0] sm:$0xff]
    %v808 = vld [vmem:[%s2 + $0xa8] sm:$0xff]
    %v809 = vld [vmem:[%s2 + $0xb0] sm:$0xff]
    %v810 = vld [vmem:[%s2 + $0xb8] sm:$0xff]
    %v811 = vld [vmem:[%s2 + $0xc0] sm:$0xff]
    %v812 = vld [vmem:[%s2 + $0xc8] sm:$0xff]
    %v813 = vld [vmem:[%s2 + $0x18] sm:$0xff]
    %v814 = vld [vmem:[%s2 + $0x20] sm:$0x1]
    %v816 = vsel %vm722, %v796, 0
    %818 = vmatprep.subr.mxu0 0.0
    %819 = vmatpush1.msra.mxu0 %v813
    %820 = vmatprep.subr.mxu0 0.0
    %821 = vmatpush1.msra.mxu0 0.0
    %822 = vmatprep.subr.mxu0 0.0
    %823 = vmatpush1.msra.mxu0 0.0
    %824 = vmatprep.subr.mxu0 0.0
    %825 = vmatpush1.msra.mxu0 0.0
    %826 = vmatprep.subr.mxu0 0.0
    %827 = vmatpush1.msra.mxu0 0.0
    %828 = vmatprep.subr.mxu0 0.0
    %829 = vmatpush1.msra.mxu0 0.0
    %830 = vmatprep.subr.mxu0 0.0
    %831 = vmatpush1.msra.mxu0 0.0
    %832 = vmatprep.subr.mxu0 0.0
    %833 = vmatpush1.msra.mxu0 0.0
    %834 = vmatprep.subr.mxu0 0.0
    %835 = vmatpush1.msra.mxu0 0.0
    %836 = vmatprep.subr.mxu0 0.0
    %837 = vmatpush1.msra.mxu0 0.0
    %838 = vmatprep.subr.mxu0 0.0
    %839 = vmatpush1.msra.mxu0 0.0
    %840 = vmatprep.subr.mxu0 0.0
    %841 = vmatpush1.msra.mxu0 0.0
    %842 = vmatprep.subr.mxu0 0.0
    %843 = vmatpush1.msra.mxu0 0.0
    %844 = vmatprep.subr.mxu0 0.0
    %845 = vmatpush1.msra.mxu0 0.0
    %846 = vmatprep.subr.mxu0 0.0
    %847 = vmatpush1.msra.mxu0 0.0
    %848 = vmatprep.subr.mxu0 0.0
    %849 = vmatpush1.msra.mxu0 0.0
    %850 = vmatprep.subr.mxu0 0.0
    %851 = vmatpush1.msra.mxu0 0.0
    %852 = vmatprep.subr.mxu0 0.0
    %853 = vmatpush1.msra.mxu0 0.0
    %854 = vmatprep.subr.mxu0 0.0
    %855 = vmatpush1.msra.mxu0 0.0
    %856 = vmatprep.subr.mxu0 0.0
    %857 = vmatpush1.msra.mxu0 0.0
    %858 = vmatprep.subr.mxu0 0.0
    %859 = vmatpush1.msra.mxu0 0.0
    %860 = vmatprep.subr.mxu0 0.0
    %861 = vmatpush1.msra.mxu0 0.0
    %862 = vmatprep.subr.mxu0 0.0
    %863 = vmatpush1.msra.mxu0 0.0
    %864 = vmatprep.subr.mxu0 0.0
    %865 = vmatpush1.msra.mxu0 0.0
    %866 = vmatprep.subr.mxu0 0.0
    %867 = vmatpush1.msra.mxu0 0.0
    %868 = vmatprep.subr.mxu0 0.0
    %869 = vmatpush1.msra.mxu0 0.0
    %870 = vmatprep.subr.mxu0 0.0
    %871 = vmatpush1.msra.mxu0 0.0
    %872 = vmatprep.subr.mxu0 0.0
    %873 = vmatpush1.msra.mxu0 0.0
    %874 = vmatprep.subr.mxu0 0.0
    %875 = vmatpush1.msra.mxu0 0.0
    %876 = vmatprep.subr.mxu0 0.0
    %877 = vmatpush1.msra.mxu0 0.0
    %878 = vmatprep.subr.mxu0 0.0
    %879 = vmatpush1.msra.mxu0 0.0
    %880 = vmatprep.subr.mxu0 0.0
    %881 = vmatpush1.msra.mxu0 0.0
    %882 = vmatprep.mubr.f32.mxu0 0.0
    %883 = vmatmul.mubr.f32.gmra.mrb[0].mxu0 %v816
    %v884 = vpop.f32.mrb[0].mxu0
    %v885 = vadd.f32 0.0, %v884
    %v886 = vpop.f32.mrb[0].mxu0
    %887 = vdwg.mxu0
    %888 = vmatprep.subr.mxu0 0.0
    %889 = vmatpush1.msra.mxu0 %v797
    %890 = vmatprep.subr.mxu0 0.0
    %891 = vmatpush1.msra.mxu0 %v798
    %892 = vmatprep.subr.mxu0 0.0
    %893 = vmatpush1.msra.mxu0 %v799
    %894 = vmatprep.subr.mxu0 0.0
    %895 = vmatpush1.msra.mxu0 %v800
    %896 = vmatprep.subr.mxu0 0.0
    %897 = vmatpush1.msra.mxu0 %v801
    %898 = vmatprep.subr.mxu0 0.0
    %899 = vmatpush1.msra.mxu0 %v802
    %900 = vmatprep.subr.mxu0 0.0
    %901 = vmatpush1.msra.mxu0 %v803
    %902 = vmatprep.subr.mxu0 0.0
    %903 = vmatpush1.msra.mxu0 %v804
    %904 = vmatprep.subr.mxu0 0.0
    %905 = vmatpush1.msra.mxu0 %v805
    %906 = vmatprep.subr.mxu0 0.0
    %907 = vmatpush1.msra.mxu0 %v806
    %908 = vmatprep.subr.mxu0 0.0
    %909 = vmatpush1.msra.mxu0 %v807
    %910 = vmatprep.subr.mxu0 0.0
    %911 = vmatpush1.msra.mxu0 %v808
    %912 = vmatprep.subr.mxu0 0.0
    %913 = vmatpush1.msra.mxu0 %v809
    %914 = vmatprep.subr.mxu0 0.0
    %915 = vmatpush1.msra.mxu0 %v810
    %916 = vmatprep.subr.mxu0 0.0
    %917 = vmatpush1.msra.mxu0 %v811
    %918 = vmatprep.subr.mxu0 0.0
    %919 = vmatpush1.msra.mxu0 %v812
    %920 = vmatprep.subr.mxu0 0.0
    %921 = vmatpush1.msra.mxu0 0.0
    %922 = vmatprep.subr.mxu0 0.0
    %923 = vmatpush1.msra.mxu0 0.0
    %924 = vmatprep.subr.mxu0 0.0
    %925 = vmatpush1.msra.mxu0 0.0
    %926 = vmatprep.subr.mxu0 0.0
    %927 = vmatpush1.msra.mxu0 0.0
    %928 = vmatprep.subr.mxu0 0.0
    %929 = vmatpush1.msra.mxu0 0.0
    %930 = vmatprep.subr.mxu0 0.0
    %931 = vmatpush1.msra.mxu0 0.0
    %932 = vmatprep.subr.mxu0 0.0
    %933 = vmatpush1.msra.mxu0 0.0
    %934 = vmatprep.subr.mxu0 0.0
    %935 = vmatpush1.msra.mxu0 0.0
    %936 = vmatprep.subr.mxu0 0.0
    %937 = vmatpush1.msra.mxu0 0.0
    %938 = vmatprep.subr.mxu0 0.0
    %939 = vmatpush1.msra.mxu0 0.0
    %940 = vmatprep.subr.mxu0 0.0
    %941 = vmatpush1.msra.mxu0 0.0
    %942 = vmatprep.subr.mxu0 0.0
    %943 = vmatpush1.msra.mxu0 0.0
    %944 = vmatprep.subr.mxu0 0.0
    %945 = vmatpush1.msra.mxu0 0.0
    %946 = vmatprep.subr.mxu0 0.0
    %947 = vmatpush1.msra.mxu0 0.0
    %948 = vmatprep.subr.mxu0 0.0
    %949 = vmatpush1.msra.mxu0 0.0
    %950 = vmatprep.subr.mxu0 0.0
    %951 = vmatpush1.msra.mxu0 0.0
    %952 = vmatprep.mubr.f32.mxu0 0.0
    %953 = vmatmul.mubr.f32.gmra.mrb[0].mxu0 %v712
    %v954 = vpop.f32.mrb[0].mxu0
    %v955 = vadd.f32 %v885, %v954
    %v956 = vpop.f32.mrb[0].mxu0
    %957 = vdwg.mxu0
    %v958 = vlaneseq
    %v959 = vshrl.u32 %v958, 7
    %v960 = vsub.s32 0, %v959
    %v961 = vrot.slane %v814, %v960
    %v962 = vadd.f32 %v955, %v961
    %v963 = vmax.f32 %v962, 0.0
    %v964 = vld [vmem:[%s2 + $0x28] sm:$0xff]
    %v965 = vld [vmem:[%s2 + $0x30] sm:$0xff]
    %v966 = vld [vmem:[%s2 + $0x38] sm:$0xff]
    %v967 = vld [vmem:[%s2 + $0x40] sm:$0xff]
    %v968 = vld [vmem:[%s2 + $0x48] sm:$0x1]
    %v969 = vlaneseq
    %v970 = vshrl.u32 %v969, 7
    %v971 = vsub.s32 0, %v970
    %v972 = vrot.slane %v968, %v971
    %vm973 = vcmask 261120
    %v975 = vsel %vm973, %v963, 0
    %977 = vmatprep.subr.mxu0 0.0
    %978 = vmatpush1.msra.mxu0 %v964
    %979 = vmatprep.subr.mxu0 0.0
    %980 = vmatpush1.msra.mxu0 %v965
    %981 = vmatprep.subr.mxu0 0.0
    %982 = vmatpush1.msra.mxu0 %v966
    %983 = vmatprep.subr.mxu0 0.0
    %984 = vmatpush1.msra.mxu0 %v967
    %985 = vmatprep.subr.mxu0 0.0
    %986 = vmatpush1.msra.mxu0 0.0
    %987 = vmatprep.subr.mxu0 0.0
    %988 = vmatpush1.msra.mxu0 0.0
    %989 = vmatprep.subr.mxu0 0.0
    %990 = vmatpush1.msra.mxu0 0.0
    %991 = vmatprep.subr.mxu0 0.0
    %992 = vmatpush1.msra.mxu0 0.0
    %993 = vmatprep.subr.mxu0 0.0
    %994 = vmatpush1.msra.mxu0 0.0
    %995 = vmatprep.subr.mxu0 0.0
    %996 = vmatpush1.msra.mxu0 0.0
    %997 = vmatprep.subr.mxu0 0.0
    %998 = vmatpush1.msra.mxu0 0.0
    %999 = vmatprep.subr.mxu0 0.0
    %1000 = vmatpush1.msra.mxu0 0.0
    %1001 = vmatprep.subr.mxu0 0.0
    %1002 = vmatpush1.msra.mxu0 0.0
    %1003 = vmatprep.subr.mxu0 0.0
    %1004 = vmatpush1.msra.mxu0 0.0
    %1005 = vmatprep.subr.mxu0 0.0
    %1006 = vmatpush1.msra.mxu0 0.0
    %1007 = vmatprep.subr.mxu0 0.0
    %1008 = vmatpush1.msra.mxu0 0.0
    %1009 = vmatprep.subr.mxu0 0.0
    %1010 = vmatpush1.msra.mxu0 0.0
    %1011 = vmatprep.subr.mxu0 0.0
    %1012 = vmatpush1.msra.mxu0 0.0
    %1013 = vmatprep.subr.mxu0 0.0
    %1014 = vmatpush1.msra.mxu0 0.0
    %1015 = vmatprep.subr.mxu0 0.0
    %1016 = vmatpush1.msra.mxu0 0.0
    %1017 = vmatprep.subr.mxu0 0.0
    %1018 = vmatpush1.msra.mxu0 0.0
    %1019 = vmatprep.subr.mxu0 0.0
    %1020 = vmatpush1.msra.mxu0 0.0
    %1021 = vmatprep.subr.mxu0 0.0
    %1022 = vmatpush1.msra.mxu0 0.0
    %1023 = vmatprep.subr.mxu0 0.0
    %1024 = vmatpush1.msra.mxu0 0.0
    %1025 = vmatprep.subr.mxu0 0.0
    %1026 = vmatpush1.msra.mxu0 0.0
    %1027 = vmatprep.subr.mxu0 0.0
    %1028 = vmatpush1.msra.mxu0 0.0
    %1029 = vmatprep.subr.mxu0 0.0
    %1030 = vmatpush1.msra.mxu0 0.0
    %1031 = vmatprep.subr.mxu0 0.0
    %1032 = vmatpush1.msra.mxu0 0.0
    %1033 = vmatprep.subr.mxu0 0.0
    %1034 = vmatpush1.msra.mxu0 0.0
    %1035 = vmatprep.subr.mxu0 0.0
    %1036 = vmatpush1.msra.mxu0 0.0
    %1037 = vmatprep.subr.mxu0 0.0
    %1038 = vmatpush1.msra.mxu0 0.0
    %1039 = vmatprep.subr.mxu0 0.0
    %1040 = vmatpush1.msra.mxu0 0.0
    %1041 = vmatprep.mubr.f32.mxu0 0.0
    %1042 = vmatmul.mubr.f32.gmra.mrb[0].mxu0 %v975
    %v1043 = vpop.f32.mrb[0].mxu0
    %v1044 = vadd.f32 %v972, %v1043
    %v1045 = vpop.f32.mrb[0].mxu0
    %1046 = vdwg.mxu0
    %1047 = vst [vmem:[#allocation2] sm:$0x3] %v1044
    // Predicated region
    $region14: #{slice2d_forward.1} parent=1 // pred_check
      _
    $region15: #{slice2d_forward.1} parent=1 // pred_check_branch
      %1049 = sbr.rel (0) target = $region17
    $region16: #{slice2d_forward.1} parent=1 // pred_region
      %s1051 = ssub.s32 32, 32
      %1052 = vsyncadd [#allocation3], %s1051
      %s1054 = sshll.u32 [#allocation2], 4
      %s1055 = int_to_ptr.vmem [resolvable:$true] %s1054
      %1057 = dma.vmem_to_hbm [thread:$0]  %s1055, 32, %s3, [#allocation3]
    $region17: #{slice2d_forward.1} parent=1 // pred_fallthru
      _
    // Predicated region
    $region18: #{slice2d_forward.1} parent=1 // pred_check
      _
    $region19: #{slice2d_forward.1} parent=1 // pred_check_branch
      %1059 = sbr.rel (0) target = $region21
    $region20: #{slice2d_forward.1} parent=1 // pred_region
      %1060 = dma.done [#allocation3], 32
    $region21: #{slice2d_forward.1} parent=1 // pred_fallthru
      _
    %1061 = vsyncpa [#allocation3], 1

</llo_original>
